<compile_context>
chip_gen: v5e
topology: v5e:2x2
jax: 0.10.0
libtpu: 0.0.40
codegen_flags: <defaults>
</compile_context>

<pallas_src>
import functools

import jax
import jax.numpy as jnp
from jax import lax
from jax.experimental import pallas as pl
from jax.experimental.pallas import tpu as pltpu


def _cross_attention_kernel(*refs, num_heads, head_dim, has_batch_mask):
    """One grid step: all heads of `batch_per_block` folded batches at once.

    refs (in order):
      xq_ref   : (R_q,  C)        queries, batch folded into rows
      xkv_ref  : (R_kv, C)        key/value input, batch folded into rows
      wq_ref   : (C, C)           Wq^T * softmax_scale
      wkv_ref  : (C, 2C)          [Wk^T | Wv^T]
      wp_ref   : (C, C)           Wproj^T
      bp_ref   : (1, C)           proj bias
      seg_ref  : (H*R_kv, C)      {0,1}: key-slot n belongs to the head of channel c
      bmask_ref: (R_q, H*R_kv)    additive cross-batch mask (only if has_batch_mask)
      o_ref    : (R_q, C)         output
    """
    if has_batch_mask:
        (xq_ref, xkv_ref, wq_ref, wkv_ref, wp_ref, bp_ref,
         seg_ref, bmask_ref, o_ref) = refs
    else:
        (xq_ref, xkv_ref, wq_ref, wkv_ref, wp_ref, bp_ref,
         seg_ref, o_ref) = refs
        bmask_ref = None

    C = num_heads * head_dim

    # Projections (softmax scale pre-folded into Wq on the host).
    q = jnp.dot(xq_ref[...], wq_ref[...], preferred_element_type=jnp.float32)     # (R_q, C)
    kv = jnp.dot(xkv_ref[...], wkv_ref[...], preferred_element_type=jnp.float32)  # (R_kv, 2C)
    k = kv[:, :C]
    v = kv[:, C:]

    # Block-diagonal per-head expansion: row n of k_bd / v_bd is key row (n % R_kv)
    # restricted to the channels of head (n // R_kv). Pure VPU work on tiny tiles.
    seg = seg_ref[...]                               # (H*R_kv, C) f32 {0,1}
    k_bd = jnp.tile(k, (num_heads, 1)) * seg         # (H*R_kv, C)
    v_bd = jnp.tile(v, (num_heads, 1)) * seg         # (H*R_kv, C)

    # All heads' scores in one MXU push (contract the channel axis of both operands).
    s = lax.dot_general(q, k_bd, (((1,), (1,)), ((), ())),
                        preferred_element_type=jnp.float32)      # (R_q, H*R_kv)
    if bmask_ref is not None:
        s = s + bmask_ref[...]     # -1e30 on cross-batch entries -> exp underflows to 0

    # Per-head softmax, stabilized with the global row max. The shift is constant
    # within every head's column group, so the per-head normalization stays exact.
    # TODO(synk): if score ranges across heads can differ by > ~80 (not the case for
    # this module), switch to a true per-head max to avoid denominator underflow.
    m = jnp.max(s, axis=-1, keepdims=True)
    p = jnp.exp(s - m)                                           # (R_q, H*R_kv)

    # Per-head denominators broadcast to that head's channels, and unnormalized head
    # outputs -- each one dense matmul (contraction depth H*R_kv); the output lands
    # directly in the (R_q, C) head-concat layout (no VMEM round trip, no scratch).
    denom = jnp.dot(p, seg, preferred_element_type=jnp.float32)  # (R_q, C)
    o_un = jnp.dot(p, v_bd, preferred_element_type=jnp.float32)  # (R_q, C)
    attn_out = o_un * pl.reciprocal(denom, approx=False)         # exact recip, EUP

    # Output projection + bias.
    y = jnp.dot(attn_out, wp_ref[...], preferred_element_type=jnp.float32)
    y = y + bp_ref[...]
    o_ref[...] = y.astype(o_ref.dtype)


def prepare_cross_attention_params(wq, wk, wv, wp, bp, *, num_heads, n_q, n_kv,
                                   batch_per_block, qk_scale=None):
    """One-time host-side parameter prep (call at parameter-load time, not per step).

    wq/wk/wv/wp are in nn.Linear (out, in) layout; bp is (C,).
    Returns (wq_t_scaled, wkv_t, wp_t, bp2, seg_mask, batch_mask_or_None).
    """
    C = wq.shape[0]
    assert C % num_heads == 0, "dim must be divisible by num_heads"
    head_dim = C // num_heads
    scale = qk_scale if qk_scale is not None else head_dim ** (-0.5)

    wq_t = (wq.T * scale).astype(wq.dtype)          # fold softmax scale into Wq
    wkv_t = jnp.concatenate([wk.T, wv.T], axis=1)   # (C, 2C) fused K|V projection
    wp_t = wp.T
    bp2 = bp.reshape(1, C)

    r_q = batch_per_block * n_q
    r_kv = batch_per_block * n_kv
    n_idx = jnp.arange(num_heads * r_kv)
    c_idx = jnp.arange(C)
    # seg[n, c] = 1 iff key-slot n (head n // r_kv) owns output channel c (head c // D).
    seg = ((n_idx[:, None] // r_kv) == (c_idx[None, :] // head_dim)).astype(jnp.float32)

    if batch_per_block > 1:
        row_b = jnp.arange(r_q)[:, None] // n_q           # query batch id per row
        col_b = (n_idx[None, :] % r_kv) // n_kv           # key batch id per column
        bmask = jnp.where(row_b == col_b, 0.0, -1e30).astype(jnp.float32)
    else:
        bmask = None
    return wq_t, wkv_t, wp_t, bp2, seg, bmask


def cross_attention_fwd(x_q, x_kv, params, *, num_heads, num_batch_blocks=1):
    """Run the Pallas kernel. num_batch_blocks=1 is best on v5e/v6e; use 2 on v7x so
    both TensorCores get half the batch (also removes cross-batch mask work at B=2)."""
    wq_t, wkv_t, wp_t, bp2, seg, bmask = params
    B, N_q, C = x_q.shape
    B2, N_kv, C2 = x_kv.shape
    assert B2 == B and C2 == C
    assert B % num_batch_blocks == 0
    bb = B // num_batch_blocks
    r_q, r_kv = bb * N_q, bb * N_kv
    head_dim = C // num_heads

    # Host-side layout plumbing (free): fold batch into rows.
    xq_flat = x_q.reshape(B * N_q, C)
    xkv_flat = x_kv.reshape(B * N_kv, C)

    inputs = [xq_flat, xkv_flat, wq_t, wkv_t, wp_t, bp2, seg]
    in_specs = [
        pl.BlockSpec((r_q, C), lambda g: (g, 0)),
        pl.BlockSpec((r_kv, C), lambda g: (g, 0)),
        pl.BlockSpec((C, C), lambda g: (0, 0)),
        pl.BlockSpec((C, 2 * C), lambda g: (0, 0)),
        pl.BlockSpec((C, C), lambda g: (0, 0)),
        pl.BlockSpec((1, C), lambda g: (0, 0)),
        pl.BlockSpec((num_heads * r_kv, C), lambda g: (0, 0)),
    ]
    if bmask is not None:
        inputs.append(bmask)
        in_specs.append(pl.BlockSpec((r_q, num_heads * r_kv), lambda g: (0, 0)))

    kernel = functools.partial(
        _cross_attention_kernel, num_heads=num_heads, head_dim=head_dim,
        has_batch_mask=bmask is not None)

    # Advisory cost estimate for XLA's scheduler (counts the padded block-diag work).
    flops = (2 * B * N_q * C * C                          # q projection
             + 2 * B * N_kv * C * (2 * C)                 # fused kv projection
             + 3 * 2 * B * N_q * (num_heads * r_kv) * C   # scores + denom + P@V
             + 2 * B * N_q * C * C)                       # output projection
    transcendentals = B * N_q * num_heads * r_kv
    bytes_accessed = 4 * (2 * B * N_q * C + B * N_kv * C + 4 * C * C + C
                          + num_heads * r_kv * C
                          + (r_q * num_heads * r_kv if bmask is not None else 0))

    out = pl.pallas_call(
        kernel,
        out_shape=jax.ShapeDtypeStruct((B * N_q, C), x_q.dtype),
        grid=(num_batch_blocks,),
        in_specs=in_specs,
        out_specs=pl.BlockSpec((r_q, C), lambda g: (g, 0)),
        compiler_params=pltpu.CompilerParams(
            dimension_semantics=("parallel",)),
        cost_estimate=pl.CostEstimate(
            flops=flops, transcendentals=transcendentals,
            bytes_accessed=bytes_accessed),
    )(*inputs)

    return out.reshape(B, N_q, C)


def cross_attention(x_q, x_kv, wq, wk, wv, wp, bp, *, num_heads, qk_scale=None,
                    num_batch_blocks=1):
    """Convenience wrapper: prep + run (prefer calling prepare_* once and reusing)."""
    B, N_q, _ = x_q.shape
    _, N_kv, _ = x_kv.shape
    assert B % num_batch_blocks == 0
    params = prepare_cross_attention_params(
        wq, wk, wv, wp, bp, num_heads=num_heads, n_q=N_q, n_kv=N_kv,
        batch_per_block=B // num_batch_blocks, qk_scale=qk_scale)
    return cross_attention_fwd(x_q, x_kv, params, num_heads=num_heads,
                               num_batch_blocks=num_batch_blocks)


def cross_attention_ref(x_q, x_kv, wq, wk, wv, wp, bp, *, num_heads, qk_scale=None):
    """Pure-JAX reference mirroring the PyTorch forward (qkv_bias=False, no dropout)."""
    B, N_q, C = x_q.shape
    _, N_kv, _ = x_kv.shape
    D = C // num_heads
    scale = qk_scale if qk_scale is not None else D ** (-0.5)

    q = (x_q @ wq.T).reshape(B, N_q, num_heads, D).transpose(0, 2, 1, 3)
    k = (x_kv @ wk.T).reshape(B, N_kv, num_heads, D).transpose(0, 2, 1, 3)
    v = (x_kv @ wv.T).reshape(B, N_kv, num_heads, D).transpose(0, 2, 1, 3)

    attn = jnp.einsum('bhqd,bhkd->bhqk', q, k) * scale
    attn = jax.nn.softmax(attn, axis=-1)
    x = jnp.einsum('bhqk,bhkd->bhqd', attn, v).transpose(0, 2, 1, 3).reshape(B, N_q, C)
    return x @ wp.T + bp


if __name__ == "__main__":
    # Small shapes consistent with the module: dim divisible by num_heads=8.
    B, N_q, N_kv, C, H = 2, 8, 16, 32, 8

    key = jax.random.PRNGKey(0)
    k_xq, k_xkv, k_wq, k_wk, k_wv, k_wp, k_bp = jax.random.split(key, 7)

    x_q = jax.random.normal(k_xq, (B, N_q, C), dtype=jnp.float32)
    x_kv = jax.random.normal(k_xkv, (B, N_kv, C), dtype=jnp.float32)

    # Deterministic synthetic parameters in nn.Linear layout (out, in).
    wq = jax.random.normal(k_wq, (C, C), dtype=jnp.float32) * 0.05
    wk = jax.random.normal(k_wk, (C, C), dtype=jnp.float32) * 0.05
    wv = jax.random.normal(k_wv, (C, C), dtype=jnp.float32) * 0.05
    wp = jax.random.normal(k_wp, (C, C), dtype=jnp.float32) * 0.05
    bp = jax.random.normal(k_bp, (C,), dtype=jnp.float32) * 0.05

    # Parameter prep once, then run the kernel.
    params = prepare_cross_attention_params(
        wq, wk, wv, wp, bp, num_heads=H, n_q=N_q, n_kv=N_kv, batch_per_block=B)
    out = cross_attention_fwd(x_q, x_kv, params, num_heads=H, num_batch_blocks=1)
    out = jax.block_until_ready(out)

    ref = cross_attention_ref(x_q, x_kv, wq, wk, wv, wp, bp, num_heads=H)
    assert out.shape == (B, N_q, C)
    assert jnp.allclose(out, ref, atol=1e-4, rtol=1e-4), "mismatch vs reference"

    print("KERNEL_OK")
</pallas_src>

<mosaic_0001>
module attributes {stable_mosaic.version = 11 : i64} {
  func.func @_cross_attention_kernel(%arg0: i32, %arg1: memref<16x32xf32, #tpu.memory_space<vmem>>, %arg2: memref<32x32xf32, #tpu.memory_space<vmem>>, %arg3: memref<32x32xf32, #tpu.memory_space<vmem>>, %arg4: memref<32x64xf32, #tpu.memory_space<vmem>>, %arg5: memref<32x32xf32, #tpu.memory_space<vmem>>, %arg6: memref<1x32xf32, #tpu.memory_space<vmem>>, %arg7: memref<256x32xf32, #tpu.memory_space<vmem>>, %arg8: memref<16x256xf32, #tpu.memory_space<vmem>>, %arg9: memref<16x32xf32, #tpu.memory_space<vmem>>) attributes {dimension_semantics = [#tpu.dimension_semantics<parallel>], iteration_bounds = array<i64: 1>, scalar_prefetch = 0 : i64, scratch_operands = 0 : i64, tpu.core_type = #tpu.core_type<tc>, window_params = [{transform_indices = @transform_0, window_bounds = array<i64: 16, 32>}, {transform_indices = @transform_1, window_bounds = array<i64: 32, 32>}, {pipeline_mode = #tpu.pipeline_mode<synchronous>, transform_indices = @transform_2, window_bounds = array<i64: 32, 32>}, {pipeline_mode = #tpu.pipeline_mode<synchronous>, transform_indices = @transform_3, window_bounds = array<i64: 32, 64>}, {pipeline_mode = #tpu.pipeline_mode<synchronous>, transform_indices = @transform_4, window_bounds = array<i64: 32, 32>}, {pipeline_mode = #tpu.pipeline_mode<synchronous>, transform_indices = @transform_5, window_bounds = array<i64: 1, 32>}, {pipeline_mode = #tpu.pipeline_mode<synchronous>, transform_indices = @transform_6, window_bounds = array<i64: 256, 32>}, {pipeline_mode = #tpu.pipeline_mode<synchronous>, transform_indices = @transform_7, window_bounds = array<i64: 16, 256>}, {transform_indices = @transform_8, window_bounds = array<i64: 16, 32>}]} {
    %c0 = arith.constant 0 : index
    %c0_0 = arith.constant 0 : index
    %0 = vector.load %arg1[%c0, %c0_0] : memref<16x32xf32, #tpu.memory_space<vmem>>, vector<16x32xf32>
    %c0_1 = arith.constant 0 : index
    %c0_2 = arith.constant 0 : index
    %1 = vector.load %arg3[%c0_1, %c0_2] : memref<32x32xf32, #tpu.memory_space<vmem>>, vector<32x32xf32>
    %cst = arith.constant dense<0.000000e+00> : vector<16x32xf32>
    %2 = tpu.matmul %0, %1, %cst {dimension_numbers = #tpu.dot_dimension_numbers<[1], [0], [0], [1], [0, 0, 1, 1], [], []>} : vector<16x32xf32>, vector<32x32xf32>, vector<16x32xf32> -> vector<16x32xf32>
    %c0_3 = arith.constant 0 : index
    %c0_4 = arith.constant 0 : index
    %3 = vector.load %arg2[%c0_3, %c0_4] : memref<32x32xf32, #tpu.memory_space<vmem>>, vector<32x32xf32>
    %c0_5 = arith.constant 0 : index
    %c0_6 = arith.constant 0 : index
    %4 = vector.load %arg4[%c0_5, %c0_6] : memref<32x64xf32, #tpu.memory_space<vmem>>, vector<32x64xf32>
    %cst_7 = arith.constant dense<0.000000e+00> : vector<32x64xf32>
    %5 = tpu.matmul %3, %4, %cst_7 {dimension_numbers = #tpu.dot_dimension_numbers<[1], [0], [0], [1], [0, 0, 1, 1], [], []>} : vector<32x32xf32>, vector<32x64xf32>, vector<32x64xf32> -> vector<32x64xf32>
    %6 = vector.extract_strided_slice %5 {offsets = [0, 0], sizes = [32, 32], strides = [1, 1]} : vector<32x64xf32> to vector<32x32xf32>
    %7 = vector.extract_strided_slice %5 {offsets = [0, 32], sizes = [32, 32], strides = [1, 1]} : vector<32x64xf32> to vector<32x32xf32>
    %c0_8 = arith.constant 0 : index
    %c0_9 = arith.constant 0 : index
    %8 = vector.load %arg7[%c0_8, %c0_9] : memref<256x32xf32, #tpu.memory_space<vmem>>, vector<256x32xf32>
    %9 = tpu.concatenate %6, %6, %6, %6, %6, %6, %6, %6 in 0 : vector<32x32xf32>, vector<32x32xf32>, vector<32x32xf32>, vector<32x32xf32>, vector<32x32xf32>, vector<32x32xf32>, vector<32x32xf32>, vector<32x32xf32> -> vector<256x32xf32>
    %10 = arith.mulf %9, %8 : vector<256x32xf32>
    %11 = tpu.concatenate %7, %7, %7, %7, %7, %7, %7, %7 in 0 : vector<32x32xf32>, vector<32x32xf32>, vector<32x32xf32>, vector<32x32xf32>, vector<32x32xf32>, vector<32x32xf32>, vector<32x32xf32>, vector<32x32xf32> -> vector<256x32xf32>
    %12 = arith.mulf %11, %8 : vector<256x32xf32>
    %cst_10 = arith.constant dense<0.000000e+00> : vector<16x256xf32>
    %13 = tpu.matmul %2, %10, %cst_10 {dimension_numbers = #tpu.dot_dimension_numbers<[1], [1], [0], [0], [0, 0, 1, 0], [], []>} : vector<16x32xf32>, vector<256x32xf32>, vector<16x256xf32> -> vector<16x256xf32>
    %c0_11 = arith.constant 0 : index
    %c0_12 = arith.constant 0 : index
    %14 = vector.load %arg8[%c0_11, %c0_12] : memref<16x256xf32, #tpu.memory_space<vmem>>, vector<16x256xf32>
    %15 = arith.addf %13, %14 : vector<16x256xf32>
    %cst_13 = arith.constant dense<0xFF800000> : vector<16xf32>
    %16 = vector.multi_reduction <maximumf>, %15, %cst_13 [1] : vector<16x256xf32> to vector<16xf32>
    %17 = vector.shape_cast %16 : vector<16xf32> to vector<16x1xf32>
    %18 = vector.broadcast %17 : vector<16x1xf32> to vector<16x256xf32>
    %19 = arith.subf %15, %18 : vector<16x256xf32>
    %20 = math.exp %19 : vector<16x256xf32>
    %cst_14 = arith.constant dense<0.000000e+00> : vector<16x32xf32>
    %21 = tpu.matmul %20, %8, %cst_14 {dimension_numbers = #tpu.dot_dimension_numbers<[1], [0], [0], [1], [0, 0, 1, 1], [], []>} : vector<16x256xf32>, vector<256x32xf32>, vector<16x32xf32> -> vector<16x32xf32>
    %cst_15 = arith.constant dense<0.000000e+00> : vector<16x32xf32>
    %22 = tpu.matmul %20, %12, %cst_15 {dimension_numbers = #tpu.dot_dimension_numbers<[1], [0], [0], [1], [0, 0, 1, 1], [], []>} : vector<16x256xf32>, vector<256x32xf32>, vector<16x32xf32> -> vector<16x32xf32>
    %23 = tpu.reciprocal %21 : vector<16x32xf32> -> vector<16x32xf32>
    %24 = arith.mulf %22, %23 : vector<16x32xf32>
    %c0_16 = arith.constant 0 : index
    %c0_17 = arith.constant 0 : index
    %25 = vector.load %arg5[%c0_16, %c0_17] : memref<32x32xf32, #tpu.memory_space<vmem>>, vector<32x32xf32>
    %cst_18 = arith.constant dense<0.000000e+00> : vector<16x32xf32>
    %26 = tpu.matmul %24, %25, %cst_18 {dimension_numbers = #tpu.dot_dimension_numbers<[1], [0], [0], [1], [0, 0, 1, 1], [], []>} : vector<16x32xf32>, vector<32x32xf32>, vector<16x32xf32> -> vector<16x32xf32>
    %c0_19 = arith.constant 0 : index
    %c0_20 = arith.constant 0 : index
    %27 = vector.load %arg6[%c0_19, %c0_20] : memref<1x32xf32, #tpu.memory_space<vmem>>, vector<1x32xf32>
    %28 = vector.broadcast %27 : vector<1x32xf32> to vector<16x32xf32>
    %29 = arith.addf %26, %28 : vector<16x32xf32>
    %c0_21 = arith.constant 0 : index
    %c0_22 = arith.constant 0 : index
    %30 = vector.load %arg9[%c0_21, %c0_22] : memref<16x32xf32, #tpu.memory_space<vmem>>, vector<16x32xf32>
    tpu.vector_store %arg9[%c0_21, %c0_22], %29 {strides = array<i32>} : memref<16x32xf32, #tpu.memory_space<vmem>>, vector<16x32xf32>,
    return
  }
  func.func @transform_0(%arg0: i32) -> (i32, i32) {
    %c0_i32 = arith.constant 0 : i32
    %c0_i32_0 = arith.constant 0 : i32
    return %arg0, %c0_i32 : i32, i32
  }
  func.func @transform_1(%arg0: i32) -> (i32, i32) {
    %c0_i32 = arith.constant 0 : i32
    %c0_i32_0 = arith.constant 0 : i32
    return %arg0, %c0_i32 : i32, i32
  }
  func.func @transform_2(%arg0: i32) -> (i32, i32) {
    %c0_i32 = arith.constant 0 : i32
    %c0_i32_0 = arith.constant 0 : i32
    %c0_i32_1 = arith.constant 0 : i32
    return %c0_i32, %c0_i32_0 : i32, i32
  }
  func.func @transform_3(%arg0: i32) -> (i32, i32) {
    %c0_i32 = arith.constant 0 : i32
    %c0_i32_0 = arith.constant 0 : i32
    %c0_i32_1 = arith.constant 0 : i32
    return %c0_i32, %c0_i32_0 : i32, i32
  }
  func.func @transform_4(%arg0: i32) -> (i32, i32) {
    %c0_i32 = arith.constant 0 : i32
    %c0_i32_0 = arith.constant 0 : i32
    %c0_i32_1 = arith.constant 0 : i32
    return %c0_i32, %c0_i32_0 : i32, i32
  }
  func.func @transform_5(%arg0: i32) -> (i32, i32) {
    %c0_i32 = arith.constant 0 : i32
    %c0_i32_0 = arith.constant 0 : i32
    %c0_i32_1 = arith.constant 0 : i32
    return %c0_i32, %c0_i32_0 : i32, i32
  }
  func.func @transform_6(%arg0: i32) -> (i32, i32) {
    %c0_i32 = arith.constant 0 : i32
    %c0_i32_0 = arith.constant 0 : i32
    %c0_i32_1 = arith.constant 0 : i32
    return %c0_i32, %c0_i32_0 : i32, i32
  }
  func.func @transform_7(%arg0: i32) -> (i32, i32) {
    %c0_i32 = arith.constant 0 : i32
    %c0_i32_0 = arith.constant 0 : i32
    %c0_i32_1 = arith.constant 0 : i32
    return %c0_i32, %c0_i32_0 : i32, i32
  }
  func.func @transform_8(%arg0: i32) -> (i32, i32) {
    %c0_i32 = arith.constant 0 : i32
    %c0_i32_0 = arith.constant 0 : i32
    return %arg0, %c0_i32 : i32, i32
  }
}

</mosaic_0001>

<llo_original>
// kernel: tpu_custom_call.1
$region0: #{tpu_custom_call.1}
  #allocation0 [shape = 'u32[]', space=smem, size = 0x4, offset = 0x4, fixed_abs, tag = 'smem constant byte address 0x4 - core index']
  #allocation1 [shape = 'u32[72,128]{1,0:T(1,128)}', space=vmem, size = 0x9000, scoped, tag = 'internal scratch']
  %s0 = inlined_call_operand.vmem [shape: f32[16,32], index: 0, kind: input, shape index: {}]
  %s1 = inlined_call_operand.vmem [shape: f32[32,32], index: 1, kind: input, shape index: {}]
  %s2 = inlined_call_operand.vmem [shape: f32[32,32], index: 2, kind: input, shape index: {}]
  %s3 = inlined_call_operand.vmem [shape: f32[32,64], index: 3, kind: input, shape index: {}]
  %s4 = inlined_call_operand.vmem [shape: f32[32,32], index: 4, kind: input, shape index: {}]
  %s5 = inlined_call_operand.vmem [shape: f32[1,32], index: 5, kind: input, shape index: {}]
  %s6 = inlined_call_operand.vmem [shape: f32[256,32], index: 6, kind: input, shape index: {}]
  %s7 = inlined_call_operand.vmem [shape: f32[16,256], index: 7, kind: input, shape index: {}]
  %s8 = inlined_call_operand.hbm [shape: f32[16,32], index: 8, kind: output, shape index: {}]
  %s9 = sld [smem:[#allocation0]]
  $region42: #{tpu_custom_call.1} parent=0
    _
  %s11 = ssub.s32 1, %s9
  %s12 = scalar_select 0, %s11, %s9
  $region1: #{tpu_custom_call.1} parent=0
    #allocation2 [shape = 'u8[8192]{0}', space=vmem, size = 0x2000, scoped, tag = 'output window, operand 0, single buffered']
    #allocation3 [shape = 's32[1]{0}', space=sflag, size = 0x4, scoped, tag = 'scoped memory for tpu_custom_call.1']
    %13 = vsyncpa [#allocation3], 0
    // Predicated region
    $region2: #{tpu_custom_call.1} parent=1 // pred_check
      _
    $region3: #{tpu_custom_call.1} parent=1 // pred_check_branch
      %15 = sbr.rel (0) target = $region5
    $region4: #{tpu_custom_call.1} parent=1 // pred_region
      _
    $region5: #{tpu_custom_call.1} parent=1 // pred_fallthru
      _
    // Predicated region
    $region6: #{tpu_custom_call.1} parent=1 // pred_check
      _
    $region7: #{tpu_custom_call.1} parent=1 // pred_check_branch
      %17 = sbr.rel (0) target = $region9
    $region8: #{tpu_custom_call.1} parent=1 // pred_region
      _
    $region9: #{tpu_custom_call.1} parent=1 // pred_fallthru
      _
    // Predicated region
    $region10: #{tpu_custom_call.1} parent=1 // pred_check
      _
    $region11: #{tpu_custom_call.1} parent=1 // pred_check_branch
      %19 = sbr.rel (0) target = $region13
    $region12: #{tpu_custom_call.1} parent=1 // pred_region
      _
    $region13: #{tpu_custom_call.1} parent=1 // pred_fallthru
      _
    // Predicated region
    $region14: #{tpu_custom_call.1} parent=1 // pred_check
      _
    $region15: #{tpu_custom_call.1} parent=1 // pred_check_branch
      %21 = sbr.rel (0) target = $region17
    $region16: #{tpu_custom_call.1} parent=1 // pred_region
      _
    $region17: #{tpu_custom_call.1} parent=1 // pred_fallthru
      _
    // Predicated region
    $region18: #{tpu_custom_call.1} parent=1 // pred_check
      _
    $region19: #{tpu_custom_call.1} parent=1 // pred_check_branch
      %23 = sbr.rel (0) target = $region21
    $region20: #{tpu_custom_call.1} parent=1 // pred_region
      _
    $region21: #{tpu_custom_call.1} parent=1 // pred_fallthru
      _
    // Predicated region
    $region22: #{tpu_custom_call.1} parent=1 // pred_check
      _
    $region23: #{tpu_custom_call.1} parent=1 // pred_check_branch
      %25 = sbr.rel (0) target = $region25
    $region24: #{tpu_custom_call.1} parent=1 // pred_region
      _
    $region25: #{tpu_custom_call.1} parent=1 // pred_fallthru
      _
    // Predicated region
    $region26: #{tpu_custom_call.1} parent=1 // pred_check
      _
    $region27: #{tpu_custom_call.1} parent=1 // pred_check_branch
      %27 = sbr.rel (0) target = $region29
    $region28: #{tpu_custom_call.1} parent=1 // pred_region
      _
    $region29: #{tpu_custom_call.1} parent=1 // pred_fallthru
      _
    // Predicated region
    $region30: #{tpu_custom_call.1} parent=1 // pred_check
      _
    $region31: #{tpu_custom_call.1} parent=1 // pred_check_branch
      %29 = sbr.rel (0) target = $region33
    $region32: #{tpu_custom_call.1} parent=1 // pred_region
      _
    $region33: #{tpu_custom_call.1} parent=1 // pred_fallthru
      _
    %v30 = vld [vmem:[%s0] sm:$0xff]
    %v31 = vld [vmem:[%s0 + $0x8] sm:$0xff]
    %v32 = vld [vmem:[%s2] sm:$0xff]
    %v33 = vld [vmem:[%s2 + $0x8] sm:$0xff]
    %v34 = vld [vmem:[%s2 + $0x10] sm:$0xff]
    %v35 = vld [vmem:[%s2 + $0x18] sm:$0xff]
    %vm36 = vcmask 261120
    %v38 = vsel %vm36, %v30, 0
    %v41 = vsel %vm36, %v31, 0
    %43 = vmatpush.msra.mxu0 0.0
    %44 = vmatpush.msra.mxu0 0.0
    %45 = vmatpush.msra.mxu0 0.0
    %46 = vmatpush.msra.mxu0 0.0
    %47 = vmatpush.msra.mxu0 0.0
    %48 = vmatpush.msra.mxu0 0.0
    %49 = vmatpush.msra.mxu0 0.0
    %50 = vmatpush.msra.mxu0 0.0
    %51 = vmatpush.msra.mxu0 0.0
    %52 = vmatpush.msra.mxu0 0.0
    %53 = vmatpush.msra.mxu0 0.0
    %54 = vmatpush.msra.mxu0 0.0
    %55 = vmatpush.msra.mxu0 %v35
    %56 = vmatpush.msra.mxu0 %v34
    %57 = vmatpush.msra.mxu0 %v33
    %58 = vmatpush.msra.mxu0 %v32
    %59 = vmatmul.f32.gmra.mxu0 %v38
    %v60 = vpop.f32.mrf.mxu0
    %v61 = vadd.f32 0.0, %v60
    %62 = vmatmul.f32.gmra.mxu0 %v41
    %v63 = vpop.f32.mrf.mxu0
    %v64 = vadd.f32 0.0, %v63
    %65 = vdwg.mxu0
    %v66 = vld [vmem:[%s1] sm:$0xff]
    %v67 = vld [vmem:[%s1 + $0x8] sm:$0xff]
    %v68 = vld [vmem:[%s1 + $0x10] sm:$0xff]
    %v69 = vld [vmem:[%s1 + $0x18] sm:$0xff]
    %v70 = vld [vmem:[%s3] sm:$0xff]
    %v71 = vld [vmem:[%s3 + $0x8] sm:$0xff]
    %v72 = vld [vmem:[%s3 + $0x10] sm:$0xff]
    %v73 = vld [vmem:[%s3 + $0x18] sm:$0xff]
    %v75 = vsel %vm36, %v66, 0
    %v78 = vsel %vm36, %v67, 0
    %v81 = vsel %vm36, %v68, 0
    %v84 = vsel %vm36, %v69, 0
    %86 = vmatpush.msra.mxu0 0.0
    %87 = vmatpush.msra.mxu0 0.0
    %88 = vmatpush.msra.mxu0 0.0
    %89 = vmatpush.msra.mxu0 0.0
    %90 = vmatpush.msra.mxu0 0.0
    %91 = vmatpush.msra.mxu0 0.0
    %92 = vmatpush.msra.mxu0 0.0
    %93 = vmatpush.msra.mxu0 0.0
    %94 = vmatpush.msra.mxu0 0.0
    %95 = vmatpush.msra.mxu0 0.0
    %96 = vmatpush.msra.mxu0 0.0
    %97 = vmatpush.msra.mxu0 0.0
    %98 = vmatpush.msra.mxu0 %v73
    %99 = vmatpush.msra.mxu0 %v72
    %100 = vmatpush.msra.mxu0 %v71
    %101 = vmatpush.msra.mxu0 %v70
    %102 = vmatmul.f32.gmra.mxu0 %v75
    %v103 = vpop.f32.mrf.mxu0
    %v104 = vadd.f32 0.0, %v103
    %105 = vmatmul.f32.gmra.mxu0 %v78
    %v106 = vpop.f32.mrf.mxu0
    %v107 = vadd.f32 0.0, %v106
    %108 = vmatmul.f32.gmra.mxu0 %v81
    %v109 = vpop.f32.mrf.mxu0
    %v110 = vadd.f32 0.0, %v109
    %111 = vmatmul.f32.gmra.mxu0 %v84
    %v112 = vpop.f32.mrf.mxu0
    %v113 = vadd.f32 0.0, %v112
    %114 = vdwg.mxu0
    %v115 = vld [vmem:[%s6] sm:$0xff]
    %v116 = vld [vmem:[%s6 + $0x8] sm:$0xff]
    %v117 = vld [vmem:[%s6 + $0x10] sm:$0xff]
    %v118 = vld [vmem:[%s6 + $0x18] sm:$0xff]
    %v119 = vld [vmem:[%s6 + $0x20] sm:$0xff]
    %v120 = vld [vmem:[%s6 + $0x28] sm:$0xff]
    %v121 = vld [vmem:[%s6 + $0x30] sm:$0xff]
    %v122 = vld [vmem:[%s6 + $0x38] sm:$0xff]
    %v123 = vld [vmem:[%s6 + $0x40] sm:$0xff]
    %v124 = vld [vmem:[%s6 + $0x48] sm:$0xff]
    %v125 = vld [vmem:[%s6 + $0x50] sm:$0xff]
    %v126 = vld [vmem:[%s6 + $0x58] sm:$0xff]
    %v127 = vld [vmem:[%s6 + $0x60] sm:$0xff]
    %v128 = vld [vmem:[%s6 + $0x68] sm:$0xff]
    %v129 = vld [vmem:[%s6 + $0x70] sm:$0xff]
    %v130 = vld [vmem:[%s6 + $0x78] sm:$0xff]
    %v131 = vld [vmem:[%s6 + $0x80] sm:$0xff]
    %v132 = vld [vmem:[%s6 + $0x88] sm:$0xff]
    %v133 = vld [vmem:[%s6 + $0x90] sm:$0xff]
    %v134 = vld [vmem:[%s6 + $0x98] sm:$0xff]
    %v135 = vld [vmem:[%s6 + $0xa0] sm:$0xff]
    %v136 = vld [vmem:[%s6 + $0xa8] sm:$0xff]
    %v137 = vld [vmem:[%s6 + $0xb0] sm:$0xff]
    %v138 = vld [vmem:[%s6 + $0xb8] sm:$0xff]
    %v139 = vld [vmem:[%s6 + $0xc0] sm:$0xff]
    %v140 = vld [vmem:[%s6 + $0xc8] sm:$0xff]
    %v141 = vld [vmem:[%s6 + $0xd0] sm:$0xff]
    %v142 = vld [vmem:[%s6 + $0xd8] sm:$0xff]
    %v143 = vld [vmem:[%s6 + $0xe0] sm:$0xff]
    %v144 = vld [vmem:[%s6 + $0xe8] sm:$0xff]
    %v145 = vld [vmem:[%s6 + $0xf0] sm:$0xff]
    %v146 = vld [vmem:[%s6 + $0xf8] sm:$0xff]
    %v147 = vmul.f32 %v104, %v115
    %v148 = vmul.f32 %v107, %v116
    %v149 = vmul.f32 %v110, %v117
    %v150 = vmul.f32 %v113, %v118
    %v151 = vmul.f32 %v104, %v119
    %v152 = vmul.f32 %v107, %v120
    %v153 = vmul.f32 %v110, %v121
    %v154 = vmul.f32 %v113, %v122
    %v155 = vmul.f32 %v104, %v123
    %v156 = vmul.f32 %v107, %v124
    %v157 = vmul.f32 %v110, %v125
    %v158 = vmul.f32 %v113, %v126
    %v159 = vmul.f32 %v104, %v127
    %v160 = vmul.f32 %v107, %v128
    %v161 = vmul.f32 %v110, %v129
    %v162 = vmul.f32 %v113, %v130
    %v163 = vmul.f32 %v104, %v131
    %v164 = vmul.f32 %v107, %v132
    %v165 = vmul.f32 %v110, %v133
    %v166 = vmul.f32 %v113, %v134
    %v167 = vmul.f32 %v104, %v135
    %v168 = vmul.f32 %v107, %v136
    %v169 = vmul.f32 %v110, %v137
    %v170 = vmul.f32 %v113, %v138
    %v171 = vmul.f32 %v104, %v139
    %v172 = vmul.f32 %v107, %v140
    %v173 = vmul.f32 %v110, %v141
    %v174 = vmul.f32 %v113, %v142
    %v175 = vmul.f32 %v104, %v143
    %v176 = vmul.f32 %v107, %v144
    %v177 = vmul.f32 %v110, %v145
    %v178 = vmul.f32 %v113, %v146
    %211 = vrot.lane.b32.xlu0 %v115, 32
    %v212 = vpop.permute.xlu0 %211
    %213 = vrot.lane.b32.xlu0 %v116, 32
    %v214 = vpop.permute.xlu0 %213
    %215 = vrot.lane.b32.xlu0 %v117, 32
    %v216 = vpop.permute.xlu0 %215
    %217 = vrot.lane.b32.xlu0 %v118, 32
    %v218 = vpop.permute.xlu0 %217
    %219 = vrot.lane.b32.xlu0 %v119, 32
    %v220 = vpop.permute.xlu0 %219
    %221 = vrot.lane.b32.xlu0 %v120, 32
    %v222 = vpop.permute.xlu0 %221
    %223 = vrot.lane.b32.xlu0 %v121, 32
    %v224 = vpop.permute.xlu0 %223
    %225 = vrot.lane.b32.xlu0 %v122, 32
    %v226 = vpop.permute.xlu0 %225
    %227 = vrot.lane.b32.xlu0 %v123, 32
    %v228 = vpop.permute.xlu0 %227
    %229 = vrot.lane.b32.xlu0 %v124, 32
    %v230 = vpop.permute.xlu0 %229
    %231 = vrot.lane.b32.xlu0 %v125, 32
    %v232 = vpop.permute.xlu0 %231
    %233 = vrot.lane.b32.xlu0 %v126, 32
    %v234 = vpop.permute.xlu0 %233
    %235 = vrot.lane.b32.xlu0 %v127, 32
    %v236 = vpop.permute.xlu0 %235
    %237 = vrot.lane.b32.xlu0 %v128, 32
    %v238 = vpop.permute.xlu0 %237
    %239 = vrot.lane.b32.xlu0 %v129, 32
    %v240 = vpop.permute.xlu0 %239
    %241 = vrot.lane.b32.xlu0 %v130, 32
    %v242 = vpop.permute.xlu0 %241
    %243 = vrot.lane.b32.xlu0 %v131, 32
    %v244 = vpop.permute.xlu0 %243
    %245 = vrot.lane.b32.xlu0 %v132, 32
    %v246 = vpop.permute.xlu0 %245
    %247 = vrot.lane.b32.xlu0 %v133, 32
    %v248 = vpop.permute.xlu0 %247
    %249 = vrot.lane.b32.xlu0 %v134, 32
    %v250 = vpop.permute.xlu0 %249
    %251 = vrot.lane.b32.xlu0 %v135, 32
    %v252 = vpop.permute.xlu0 %251
    %253 = vrot.lane.b32.xlu0 %v136, 32
    %v254 = vpop.permute.xlu0 %253
    %255 = vrot.lane.b32.xlu0 %v137, 32
    %v256 = vpop.permute.xlu0 %255
    %257 = vrot.lane.b32.xlu0 %v138, 32
    %v258 = vpop.permute.xlu0 %257
    %259 = vrot.lane.b32.xlu0 %v139, 32
    %v260 = vpop.permute.xlu0 %259
    %261 = vrot.lane.b32.xlu0 %v140, 32
    %v262 = vpop.permute.xlu0 %261
    %263 = vrot.lane.b32.xlu0 %v141, 32
    %v264 = vpop.permute.xlu0 %263
    %265 = vrot.lane.b32.xlu0 %v142, 32
    %v266 = vpop.permute.xlu0 %265
    %267 = vrot.lane.b32.xlu0 %v143, 32
    %v268 = vpop.permute.xlu0 %267
    %269 = vrot.lane.b32.xlu0 %v144, 32
    %v270 = vpop.permute.xlu0 %269
    %271 = vrot.lane.b32.xlu0 %v145, 32
    %v272 = vpop.permute.xlu0 %271
    %273 = vrot.lane.b32.xlu0 %v146, 32
    %v274 = vpop.permute.xlu0 %273
    %v307 = vmul.f32 %v104, %v212
    %v308 = vmul.f32 %v107, %v214
    %v309 = vmul.f32 %v110, %v216
    %v310 = vmul.f32 %v113, %v218
    %v311 = vmul.f32 %v104, %v220
    %v312 = vmul.f32 %v107, %v222
    %v313 = vmul.f32 %v110, %v224
    %v314 = vmul.f32 %v113, %v226
    %v315 = vmul.f32 %v104, %v228
    %v316 = vmul.f32 %v107, %v230
    %v317 = vmul.f32 %v110, %v232
    %v318 = vmul.f32 %v113, %v234
    %v319 = vmul.f32 %v104, %v236
    %v320 = vmul.f32 %v107, %v238
    %v321 = vmul.f32 %v110, %v240
    %v322 = vmul.f32 %v113, %v242
    %v323 = vmul.f32 %v104, %v244
    %v324 = vmul.f32 %v107, %v246
    %v325 = vmul.f32 %v110, %v248
    %v326 = vmul.f32 %v113, %v250
    %v327 = vmul.f32 %v104, %v252
    %v328 = vmul.f32 %v107, %v254
    %v329 = vmul.f32 %v110, %v256
    %v330 = vmul.f32 %v113, %v258
    %v331 = vmul.f32 %v104, %v260
    %v332 = vmul.f32 %v107, %v262
    %v333 = vmul.f32 %v110, %v264
    %v334 = vmul.f32 %v113, %v266
    %v335 = vmul.f32 %v104, %v268
    %v336 = vmul.f32 %v107, %v270
    %v337 = vmul.f32 %v110, %v272
    %v338 = vmul.f32 %v113, %v274
    %v339 = vld [vmem:[%s7] sm:$0xff]
    %v340 = vld [vmem:[%s7 + $0x8] sm:$0xff]
    %v341 = vld [vmem:[%s7 + $0x10] sm:$0xff]
    %v342 = vld [vmem:[%s7 + $0x18] sm:$0xff]
    %v344 = vsel %vm36, %v61, 0
    %v347 = vsel %vm36, %v64, 0
    %v350 = vsel %vm36, %v147, 0
    %v353 = vsel %vm36, %v148, 0
    %v356 = vsel %vm36, %v149, 0
    %v359 = vsel %vm36, %v150, 0
    %v362 = vsel %vm36, %v151, 0
    %v365 = vsel %vm36, %v152, 0
    %v368 = vsel %vm36, %v153, 0
    %v371 = vsel %vm36, %v154, 0
    %v374 = vsel %vm36, %v155, 0
    %v377 = vsel %vm36, %v156, 0
    %v380 = vsel %vm36, %v157, 0
    %v383 = vsel %vm36, %v158, 0
    %v386 = vsel %vm36, %v159, 0
    %v389 = vsel %vm36, %v160, 0
    %v392 = vsel %vm36, %v161, 0
    %v395 = vsel %vm36, %v162, 0
    %v398 = vsel %vm36, %v163, 0
    %v401 = vsel %vm36, %v164, 0
    %v404 = vsel %vm36, %v165, 0
    %v407 = vsel %vm36, %v166, 0
    %v410 = vsel %vm36, %v167, 0
    %v413 = vsel %vm36, %v168, 0
    %v416 = vsel %vm36, %v169, 0
    %v419 = vsel %vm36, %v170, 0
    %v422 = vsel %vm36, %v171, 0
    %v425 = vsel %vm36, %v172, 0
    %v428 = vsel %vm36, %v173, 0
    %v431 = vsel %vm36, %v174, 0
    %v434 = vsel %vm36, %v175, 0
    %v437 = vsel %vm36, %v176, 0
    %v440 = vsel %vm36, %v177, 0
    %v443 = vsel %vm36, %v178, 0
    %445 = vmatpush.xpose.msra.mxu0 %v395
    %446 = vmatpush.xpose.msra.mxu0 %v392
    %447 = vmatpush.xpose.msra.mxu0 %v389
    %448 = vmatpush.xpose.msra.mxu0 %v386
    %449 = vmatpush.xpose.msra.mxu0 %v383
    %450 = vmatpush.xpose.msra.mxu0 %v380
    %451 = vmatpush.xpose.msra.mxu0 %v377
    %452 = vmatpush.xpose.msra.mxu0 %v374
    %453 = vmatpush.xpose.msra.mxu0 %v371
    %454 = vmatpush.xpose.msra.mxu0 %v368
    %455 = vmatpush.xpose.msra.mxu0 %v365
    %456 = vmatpush.xpose.msra.mxu0 %v362
    %457 = vmatpush.xpose.msra.mxu0 %v359
    %458 = vmatpush.xpose.msra.mxu0 %v356
    %459 = vmatpush.xpose.msra.mxu0 %v353
    %460 = vmatpush.xpose.msra.mxu0 %v350
    %461 = vmatmul.f32.gmra.mxu0 %v344
    %v462 = vpop.f32.mrf.mxu0
    %v463 = vadd.f32 %v339, %v462
    %464 = vmatmul.f32.gmra.mxu0 %v347
    %v465 = vpop.f32.mrf.mxu0
    %v466 = vadd.f32 %v341, %v465
    %467 = vdwg.mxu0
    %468 = vmatpush.xpose.msra.mxu0 %v443
    %469 = vmatpush.xpose.msra.mxu0 %v440
    %470 = vmatpush.xpose.msra.mxu0 %v437
    %471 = vmatpush.xpose.msra.mxu0 %v434
    %472 = vmatpush.xpose.msra.mxu0 %v431
    %473 = vmatpush.xpose.msra.mxu0 %v428
    %474 = vmatpush.xpose.msra.mxu0 %v425
    %475 = vmatpush.xpose.msra.mxu0 %v422
    %476 = vmatpush.xpose.msra.mxu0 %v419
    %477 = vmatpush.xpose.msra.mxu0 %v416
    %478 = vmatpush.xpose.msra.mxu0 %v413
    %479 = vmatpush.xpose.msra.mxu0 %v410
    %480 = vmatpush.xpose.msra.mxu0 %v407
    %481 = vmatpush.xpose.msra.mxu0 %v404
    %482 = vmatpush.xpose.msra.mxu0 %v401
    %483 = vmatpush.xpose.msra.mxu0 %v398
    %484 = vmatmul.f32.gmra.mxu0 %v344
    %v485 = vpop.f32.mrf.mxu0
    %v486 = vadd.f32 %v340, %v485
    %487 = vmatmul.f32.gmra.mxu0 %v347
    %v488 = vpop.f32.mrf.mxu0
    %v489 = vadd.f32 %v342, %v488
    %490 = vdwg.mxu0
    %v491 = vmax.f32 %v463, %v486
    %492 = vmax.xlane.f32.xlu0 %v491
    %v493 = vpop.xlane.xlu0 %492
    %v494 = vmax.f32 %v466, %v489
    %495 = vmax.xlane.f32.xlu0 %v494
    %v496 = vpop.xlane.xlu0 %495
    %v497 = vsub.f32 %v463, %v493
    %v498 = vsub.f32 %v486, %v493
    %v499 = vsub.f32 %v466, %v496
    %v500 = vsub.f32 %v489, %v496
    %v501 = vmul.f32 %v497, 1.442695
    %v502 = vpow.pop %v501
    %v503 = vmul.f32 %v498, 1.442695
    %v504 = vpow.pop %v503
    %v505 = vmul.f32 %v499, 1.442695
    %v506 = vpow.pop %v505
    %v507 = vmul.f32 %v500, 1.442695
    %v508 = vpow.pop %v507
    %509 = vmatpush.msra.mxu0 %v130
    %510 = vmatpush.msra.mxu0 %v129
    %511 = vmatpush.msra.mxu0 %v128
    %512 = vmatpush.msra.mxu0 %v127
    %513 = vmatpush.msra.mxu0 %v126
    %514 = vmatpush.msra.mxu0 %v125
    %515 = vmatpush.msra.mxu0 %v124
    %516 = vmatpush.msra.mxu0 %v123
    %517 = vmatpush.msra.mxu0 %v122
    %518 = vmatpush.msra.mxu0 %v121
    %519 = vmatpush.msra.mxu0 %v120
    %520 = vmatpush.msra.mxu0 %v119
    %521 = vmatpush.msra.mxu0 %v118
    %522 = vmatpush.msra.mxu0 %v117
    %523 = vmatpush.msra.mxu0 %v116
    %524 = vmatpush.msra.mxu0 %v115
    %525 = vmatmul.f32.gmra.mxu0 %v502
    %v526 = vpop.f32.mrf.mxu0
    %v527 = vadd.f32 0.0, %v526
    %528 = vmatmul.f32.gmra.mxu0 %v506
    %v529 = vpop.f32.mrf.mxu0
    %v530 = vadd.f32 0.0, %v529
    %531 = vdwg.mxu0
    %532 = vmatpush.msra.mxu0 %v146
    %533 = vmatpush.msra.mxu0 %v145
    %534 = vmatpush.msra.mxu0 %v144
    %535 = vmatpush.msra.mxu0 %v143
    %536 = vmatpush.msra.mxu0 %v142
    %537 = vmatpush.msra.mxu0 %v141
    %538 = vmatpush.msra.mxu0 %v140
    %539 = vmatpush.msra.mxu0 %v139
    %540 = vmatpush.msra.mxu0 %v138
    %541 = vmatpush.msra.mxu0 %v137
    %542 = vmatpush.msra.mxu0 %v136
    %543 = vmatpush.msra.mxu0 %v135
    %544 = vmatpush.msra.mxu0 %v134
    %545 = vmatpush.msra.mxu0 %v133
    %546 = vmatpush.msra.mxu0 %v132
    %547 = vmatpush.msra.mxu0 %v131
    %548 = vmatmul.f32.gmra.mxu0 %v504
    %v549 = vpop.f32.mrf.mxu0
    %v550 = vadd.f32 %v527, %v549
    %551 = vmatmul.f32.gmra.mxu0 %v508
    %v552 = vpop.f32.mrf.mxu0
    %v553 = vadd.f32 %v530, %v552
    %554 = vdwg.mxu0
    %587 = vrot.lane.b32.xlu0 %v307, 96
    %v588 = vpop.permute.xlu0 %587
    %589 = vrot.lane.b32.xlu0 %v308, 96
    %v590 = vpop.permute.xlu0 %589
    %591 = vrot.lane.b32.xlu0 %v309, 96
    %v592 = vpop.permute.xlu0 %591
    %593 = vrot.lane.b32.xlu0 %v310, 96
    %v594 = vpop.permute.xlu0 %593
    %595 = vrot.lane.b32.xlu0 %v311, 96
    %v596 = vpop.permute.xlu0 %595
    %597 = vrot.lane.b32.xlu0 %v312, 96
    %v598 = vpop.permute.xlu0 %597
    %599 = vrot.lane.b32.xlu0 %v313, 96
    %v600 = vpop.permute.xlu0 %599
    %601 = vrot.lane.b32.xlu0 %v314, 96
    %v602 = vpop.permute.xlu0 %601
    %603 = vrot.lane.b32.xlu0 %v315, 96
    %v604 = vpop.permute.xlu0 %603
    %605 = vrot.lane.b32.xlu0 %v316, 96
    %v606 = vpop.permute.xlu0 %605
    %607 = vrot.lane.b32.xlu0 %v317, 96
    %v608 = vpop.permute.xlu0 %607
    %609 = vrot.lane.b32.xlu0 %v318, 96
    %v610 = vpop.permute.xlu0 %609
    %611 = vrot.lane.b32.xlu0 %v319, 96
    %v612 = vpop.permute.xlu0 %611
    %613 = vrot.lane.b32.xlu0 %v320, 96
    %v614 = vpop.permute.xlu0 %613
    %615 = vrot.lane.b32.xlu0 %v321, 96
    %v616 = vpop.permute.xlu0 %615
    %617 = vrot.lane.b32.xlu0 %v322, 96
    %v618 = vpop.permute.xlu0 %617
    %619 = vrot.lane.b32.xlu0 %v323, 96
    %v620 = vpop.permute.xlu0 %619
    %621 = vrot.lane.b32.xlu0 %v324, 96
    %v622 = vpop.permute.xlu0 %621
    %623 = vrot.lane.b32.xlu0 %v325, 96
    %v624 = vpop.permute.xlu0 %623
    %625 = vrot.lane.b32.xlu0 %v326, 96
    %v626 = vpop.permute.xlu0 %625
    %627 = vrot.lane.b32.xlu0 %v327, 96
    %v628 = vpop.permute.xlu0 %627
    %629 = vrot.lane.b32.xlu0 %v328, 96
    %v630 = vpop.permute.xlu0 %629
    %631 = vrot.lane.b32.xlu0 %v329, 96
    %v632 = vpop.permute.xlu0 %631
    %633 = vrot.lane.b32.xlu0 %v330, 96
    %v634 = vpop.permute.xlu0 %633
    %635 = vrot.lane.b32.xlu0 %v331, 96
    %v636 = vpop.permute.xlu0 %635
    %637 = vrot.lane.b32.xlu0 %v332, 96
    %v638 = vpop.permute.xlu0 %637
    %639 = vrot.lane.b32.xlu0 %v333, 96
    %v640 = vpop.permute.xlu0 %639
    %641 = vrot.lane.b32.xlu0 %v334, 96
    %v642 = vpop.permute.xlu0 %641
    %643 = vrot.lane.b32.xlu0 %v335, 96
    %v644 = vpop.permute.xlu0 %643
    %645 = vrot.lane.b32.xlu0 %v336, 96
    %v646 = vpop.permute.xlu0 %645
    %647 = vrot.lane.b32.xlu0 %v337, 96
    %v648 = vpop.permute.xlu0 %647
    %649 = vrot.lane.b32.xlu0 %v338, 96
    %v650 = vpop.permute.xlu0 %649
    %683 = vmatpush.msra.mxu0 %v618
    %684 = vmatpush.msra.mxu0 %v616
    %685 = vmatpush.msra.mxu0 %v614
    %686 = vmatpush.msra.mxu0 %v612
    %687 = vmatpush.msra.mxu0 %v610
    %688 = vmatpush.msra.mxu0 %v608
    %689 = vmatpush.msra.mxu0 %v606
    %690 = vmatpush.msra.mxu0 %v604
    %691 = vmatpush.msra.mxu0 %v602
    %692 = vmatpush.msra.mxu0 %v600
    %693 = vmatpush.msra.mxu0 %v598
    %694 = vmatpush.msra.mxu0 %v596
    %695 = vmatpush.msra.mxu0 %v594
    %696 = vmatpush.msra.mxu0 %v592
    %697 = vmatpush.msra.mxu0 %v590
    %698 = vmatpush.msra.mxu0 %v588
    %699 = vmatmul.f32.gmra.mxu0 %v502
    %v700 = vpop.f32.mrf.mxu0
    %v701 = vadd.f32 0.0, %v700
    %702 = vmatmul.f32.gmra.mxu0 %v506
    %v703 = vpop.f32.mrf.mxu0
    %v704 = vadd.f32 0.0, %v703
    %705 = vdwg.mxu0
    %706 = vmatpush.msra.mxu0 %v650
    %707 = vmatpush.msra.mxu0 %v648
    %708 = vmatpush.msra.mxu0 %v646
    %709 = vmatpush.msra.mxu0 %v644
    %710 = vmatpush.msra.mxu0 %v642
    %711 = vmatpush.msra.mxu0 %v640
    %712 = vmatpush.msra.mxu0 %v638
    %713 = vmatpush.msra.mxu0 %v636
    %714 = vmatpush.msra.mxu0 %v634
    %715 = vmatpush.msra.mxu0 %v632
    %716 = vmatpush.msra.mxu0 %v630
    %717 = vmatpush.msra.mxu0 %v628
    %718 = vmatpush.msra.mxu0 %v626
    %719 = vmatpush.msra.mxu0 %v624
    %720 = vmatpush.msra.mxu0 %v622
    %721 = vmatpush.msra.mxu0 %v620
    %722 = vmatmul.f32.gmra.mxu0 %v504
    %v723 = vpop.f32.mrf.mxu0
    %v724 = vadd.f32 %v701, %v723
    %725 = vmatmul.f32.gmra.mxu0 %v508
    %v726 = vpop.f32.mrf.mxu0
    %v727 = vadd.f32 %v704, %v726
    %728 = vdwg.mxu0
    %v729 = vrcp.pop %v550
    %v730 = vmul.f32 %v550, %v729
    %v731 = vsub.f32 1.0, %v730
    %v732 = vmul.f32 %v729, %v731
    %v733 = vadd.f32 %v729, %v732
    %vm734 = vweird.f32 %v550
    %vm735 = vweird.f32 %v729
    %vm736 = vmor %vm734, %vm735
    %v737 = vsel %vm736, %v729, %v733
    %v738 = vand.u32 2147483647, %v550
    %vm739 = vcmp.eq.f32.partialorder %v738, 8.507059e+37
    %v740 = vand.u32 %v550, 2147483648
    %v741 = vor.u32 1.1754944e-38, %v740
    %v742 = vsel %vm739, %v741, %v737
    %v743 = vrcp.pop %v553
    %v744 = vmul.f32 %v553, %v743
    %v745 = vsub.f32 1.0, %v744
    %v746 = vmul.f32 %v743, %v745
    %v747 = vadd.f32 %v743, %v746
    %vm748 = vweird.f32 %v553
    %vm749 = vweird.f32 %v743
    %vm750 = vmor %vm748, %vm749
    %v751 = vsel %vm750, %v743, %v747
    %v752 = vand.u32 2147483647, %v553
    %vm753 = vcmp.eq.f32.partialorder %v752, 8.507059e+37
    %v754 = vand.u32 %v553, 2147483648
    %v755 = vor.u32 1.1754944e-38, %v754
    %v756 = vsel %vm753, %v755, %v751
    %v757 = vmul.f32 %v724, %v742
    %v758 = vmul.f32 %v727, %v756
    %v759 = vld [vmem:[%s4] sm:$0xff]
    %v760 = vld [vmem:[%s4 + $0x8] sm:$0xff]
    %v761 = vld [vmem:[%s4 + $0x10] sm:$0xff]
    %v762 = vld [vmem:[%s4 + $0x18] sm:$0xff]
    %v763 = vld [vmem:[%s5] sm:$0x1]
    %v765 = vperm.slane %v763, 0
    %v768 = vsel %vm36, %v757, 0
    %v771 = vsel %vm36, %v758, 0
    %773 = vmatpush.msra.mxu0 0.0
    %774 = vmatpush.msra.mxu0 0.0
    %775 = vmatpush.msra.mxu0 0.0
    %776 = vmatpush.msra.mxu0 0.0
    %777 = vmatpush.msra.mxu0 0.0
    %778 = vmatpush.msra.mxu0 0.0
    %779 = vmatpush.msra.mxu0 0.0
    %780 = vmatpush.msra.mxu0 0.0
    %781 = vmatpush.msra.mxu0 0.0
    %782 = vmatpush.msra.mxu0 0.0
    %783 = vmatpush.msra.mxu0 0.0
    %784 = vmatpush.msra.mxu0 0.0
    %785 = vmatpush.msra.mxu0 %v762
    %786 = vmatpush.msra.mxu0 %v761
    %787 = vmatpush.msra.mxu0 %v760
    %788 = vmatpush.msra.mxu0 %v759
    %789 = vmatmul.f32.gmra.mxu0 %v768
    %v790 = vpop.f32.mrf.mxu0
    %v791 = vadd.f32 %v765, %v790
    %792 = vmatmul.f32.gmra.mxu0 %v771
    %v793 = vpop.f32.mrf.mxu0
    %v794 = vadd.f32 %v765, %v793
    %795 = vdwg.mxu0
    %796 = vst.msk [vmem:[#allocation2] sm:$0xff] %vm36, %v791
    %797 = vst.msk [vmem:[#allocation2 + $0x8] sm:$0xff] %vm36, %v794
    // Predicated region
    $region34: #{tpu_custom_call.1} parent=1 // pred_check
      _
    $region35: #{tpu_custom_call.1} parent=1 // pred_check_branch
      %799 = sbr.rel (0) target = $region37
    $region36: #{tpu_custom_call.1} parent=1 // pred_region
      %801 = vsyncadd [#allocation3], 0
      %s802 = sshll.u32 [#allocation2], 4
      %s803 = int_to_ptr.vmem [resolvable:$true] %s802
      %s804 = sshll.u32 %s8, 4
      %s805 = int_to_ptr.hbm [resolvable:$true] %s804
      %810 = dma.vmem_to_hbm [thread:$0]  %s803, 256, %s805, [#allocation3], 128, 128, 8
    $region37: #{tpu_custom_call.1} parent=1 // pred_fallthru
      _
    // Predicated region
    $region38: #{tpu_custom_call.1} parent=1 // pred_check
      _
    $region39: #{tpu_custom_call.1} parent=1 // pred_check_branch
      %812 = sbr.rel (0) target = $region41
    $region40: #{tpu_custom_call.1} parent=1 // pred_region
      %814 = dma.done [#allocation3], 256
    $region41: #{tpu_custom_call.1} parent=1 // pred_fallthru
      _
    %815 = vsyncpa [#allocation3], 1

</llo_original>
